<compile_context>
chip_gen: v6e
topology: v6e:2x2x1
jax: 0.10.0
libtpu: 0.0.40
codegen_flags: <defaults>
</compile_context>

<pallas_src>
import jax
import jax.numpy as jnp
from jax.experimental import pallas as pl
from jax.experimental.pallas import tpu as pltpu


# Any batch up to this many rows runs as a single block (no grid): the forward
# is fixed-overhead bound, and a single block of 2048 rows is < 3 MiB of VMEM.
SINGLE_BLOCK_MAX_ROWS = 2048


# ---------------------------------------------------------------------------
# Kernels
# ---------------------------------------------------------------------------
def dqn_kernel(x_ref, w1_ref, b1_ref, w2_ref, b2_ref, o_ref):
    # fc1: (B, D_in) @ (D_in, H) -> f32 accumulate, f32 bias add, ReLU.
    x = x_ref[...].astype(jnp.bfloat16)          # no-op if x already bf16
    h = jnp.dot(x, w1_ref[...], preferred_element_type=jnp.float32)
    h = jnp.maximum(h + b1_ref[...], 0.0)
    # fc2: (B, H) @ (H, D_out) -> f32 accumulate, f32 bias add.
    q = jnp.dot(h.astype(jnp.bfloat16), w2_ref[...],
                preferred_element_type=jnp.float32)
    o_ref[...] = (q + b2_ref[...]).astype(o_ref.dtype)


def dqn_argmax_kernel(x_ref, w1_ref, b1_ref, w2_ref, b2_ref, a_ref):
    # Same forward as dqn_kernel, but the consumer (greedy action selection)
    # is fused into the epilogue: only (B, 1) int32 leaves the kernel.
    x = x_ref[...].astype(jnp.bfloat16)
    h = jnp.dot(x, w1_ref[...], preferred_element_type=jnp.float32)
    h = jnp.maximum(h + b1_ref[...], 0.0)
    q = jnp.dot(h.astype(jnp.bfloat16), w2_ref[...],
                preferred_element_type=jnp.float32)
    q = q + b2_ref[...]
    # argmax over the action axis (first index on ties), built from
    # max/where/min so it lowers cleanly to VPU/XLU ops.
    ids = jax.lax.broadcasted_iota(jnp.int32, q.shape, dimension=1)
    m = jnp.max(q, axis=-1, keepdims=True)
    cand = jnp.where(q == m, ids, jnp.int32(q.shape[-1]))
    a_ref[...] = jnp.min(cand, axis=-1, keepdims=True).astype(jnp.int32)


# ---------------------------------------------------------------------------
# Parameter prep (call ONCE, not per forward)
# ---------------------------------------------------------------------------
def prepare_dqn_params(w1, b1, w2, b2):
    """One-time conversion of PyTorch nn.Linear params.

    Inputs (PyTorch layout): w1 (H, D_in), b1 (H,), w2 (D_out, H), b2 (D_out,).
    Returns kernel-layout params:
      w1_t (D_in, H) bf16, b1 (1, H) f32, w2_t (H, D_out) bf16, b2 (1, D_out) f32.
    """
    w1 = jnp.asarray(w1, jnp.float32)
    w2 = jnp.asarray(w2, jnp.float32)
    H, _ = w1.shape
    D_out = w2.shape[0]
    w1_t = w1.T.astype(jnp.bfloat16)                      # (D_in, H)
    w2_t = w2.T.astype(jnp.bfloat16)                      # (H, D_out)
    b1_2d = jnp.asarray(b1, jnp.float32).reshape(1, H)
    b2_2d = jnp.asarray(b2, jnp.float32).reshape(1, D_out)
    return w1_t, b1_2d, w2_t, b2_2d


# ---------------------------------------------------------------------------
# Wrappers
# ---------------------------------------------------------------------------
def _num_blocks(B):
    """None => single block (grid=()); int => that many batch blocks."""
    if B <= SINGLE_BLOCK_MAX_ROWS:
        return None
    # Big batches: exactly 2 large blocks so v7x megacore can shard them
    # across its 2 TensorCores (one extra grid step is negligible on 1-TC
    # chips at this size).  Fall back to a single block if B doesn't split
    # into sublane-aligned halves; VMEM is not a constraint at these shapes.
    if B % 2 == 0 and (B // 2) % 8 == 0:
        return 2
    return None


def _call(kernel, x, w1_t, b1_2d, w2_t, b2_2d, out_last_dim, out_dtype):
    B, D_in = x.shape
    H = w1_t.shape[1]
    D_out = w2_t.shape[1]
    out_shape = jax.ShapeDtypeStruct((B, out_last_dim), out_dtype)
    nblk = _num_blocks(B)

    if nblk is None:
        # Single block, no grid-step overhead.
        full = lambda shape: pl.BlockSpec(shape, lambda: (0,) * len(shape))
        return pl.pallas_call(
            kernel,
            out_shape=out_shape,
            grid=(),
            in_specs=[
                full((B, D_in)),
                full((D_in, H)),
                full((1, H)),
                full((H, D_out)),
                full((1, D_out)),
            ],
            out_specs=full((B, out_last_dim)),
        )(x, w1_t, b1_2d, w2_t, b2_2d)

    tile = B // nblk
    return pl.pallas_call(
        kernel,
        out_shape=out_shape,
        grid=(nblk,),
        in_specs=[
            pl.BlockSpec((tile, D_in), lambda i: (i, 0)),
            pl.BlockSpec((D_in, H), lambda i: (0, 0)),   # weights resident
            pl.BlockSpec((1, H), lambda i: (0, 0)),
            pl.BlockSpec((H, D_out), lambda i: (0, 0)),
            pl.BlockSpec((1, D_out), lambda i: (0, 0)),
        ],
        out_specs=pl.BlockSpec((tile, out_last_dim), lambda i: (i, 0)),
        compiler_params=pltpu.CompilerParams(
            dimension_semantics=("parallel",)),
    )(x, w1_t, b1_2d, w2_t, b2_2d)


def dqn_forward(x, w1_t, b1_2d, w2_t, b2_2d, out_dtype=jnp.float32):
    """Q(s, .) forward pass. x: (B, D_in) f32 or bf16 -> (B, D_out) out_dtype."""
    return _call(dqn_kernel, x, w1_t, b1_2d, w2_t, b2_2d,
                 out_last_dim=w2_t.shape[1], out_dtype=out_dtype)


def dqn_forward_argmax(x, w1_t, b1_2d, w2_t, b2_2d):
    """Fused acting path: argmax_a Q(s, a). Returns (B, 1) int32."""
    return _call(dqn_argmax_kernel, x, w1_t, b1_2d, w2_t, b2_2d,
                 out_last_dim=1, out_dtype=jnp.int32)


def dqn_forward_torch_layout(x, w1, b1, w2, b2):
    """Convenience wrapper taking PyTorch-layout params (prep NOT amortized;
    prefer prepare_dqn_params() once + dqn_forward() in real use)."""
    w1_t, b1_2d, w2_t, b2_2d = prepare_dqn_params(w1, b1, w2, b2)
    return dqn_forward(x, w1_t, b1_2d, w2_t, b2_2d)


def init_dqn_params(key, input_size, hidden_size, output_size, dtype=jnp.float32):
    """Deterministic synthetic init mimicking PyTorch Linear's U(-1/sqrt(in), 1/sqrt(in))."""
    k1, k2, k3, k4 = jax.random.split(key, 4)
    bound1 = 1.0 / (input_size ** 0.5)
    bound2 = 1.0 / (hidden_size ** 0.5)
    w1 = jax.random.uniform(k1, (hidden_size, input_size), dtype, -bound1, bound1)
    b1 = jax.random.uniform(k2, (hidden_size,), dtype, -bound1, bound1)
    w2 = jax.random.uniform(k3, (output_size, hidden_size), dtype, -bound2, bound2)
    b2 = jax.random.uniform(k4, (output_size,), dtype, -bound2, bound2)
    return w1, b1, w2, b2


def _reference_bf16(x, w1_t, b1_2d, w2_t, b2_2d):
    """Plain-JAX reference with the same bf16-operand / f32-accumulate math."""
    h = jnp.dot(x.astype(jnp.bfloat16), w1_t, preferred_element_type=jnp.float32)
    h = jnp.maximum(h + b1_2d, 0.0)
    out = jnp.dot(h.astype(jnp.bfloat16), w2_t, preferred_element_type=jnp.float32)
    return out + b2_2d


if __name__ == "__main__":
    # Shapes consistent with the module: input=64 (8x8 board encoding),
    # hidden=128, output=64 actions; acting batch=2.
    B, D_in, H, D_out = 2, 64, 128, 64

    key = jax.random.PRNGKey(0)
    kx, kp, kx2 = jax.random.split(key, 3)
    x = jax.random.normal(kx, (B, D_in), jnp.float32)
    w1, b1, w2, b2 = init_dqn_params(kp, D_in, H, D_out)

    # One-time param prep (transpose + bf16), amortized across calls.
    w1_t, b1_2d, w2_t, b2_2d = prepare_dqn_params(w1, b1, w2, b2)

    # --- acting path (B=2): single block, grid=() ---
    out = dqn_forward(x, w1_t, b1_2d, w2_t, b2_2d)
    out = jax.block_until_ready(out)
    assert out.shape == (B, D_out)

    ref_bf16 = _reference_bf16(x, w1_t, b1_2d, w2_t, b2_2d)
    ref_f32 = jnp.maximum(x @ w1.T + b1, 0.0) @ w2.T + b2
    assert jnp.allclose(out, ref_bf16, atol=2e-3, rtol=2e-3)
    assert jnp.allclose(out, ref_f32, atol=5e-2, rtol=5e-2)

    # --- fused argmax (greedy action) path ---
    acts = jax.block_until_ready(dqn_forward_argmax(x, w1_t, b1_2d, w2_t, b2_2d))
    assert acts.shape == (B, 1) and acts.dtype == jnp.int32
    gathered = out[jnp.arange(B), acts[:, 0]]
    assert jnp.allclose(gathered, out.max(axis=-1))

    # --- replay-sized batch (B=256): still single block (no grid overhead) ---
    B_mid = 256
    x_mid = jax.random.normal(kx2, (B_mid, D_in), jnp.float32)
    out_mid = jax.block_until_ready(dqn_forward(x_mid, w1_t, b1_2d, w2_t, b2_2d))
    assert out_mid.shape == (B_mid, D_out)
    assert jnp.allclose(out_mid, _reference_bf16(x_mid, w1_t, b1_2d, w2_t, b2_2d),
                        atol=2e-3, rtol=2e-3)

    # --- very large batch (B=4096): 2 "parallel" blocks (megacore on v7x) ---
    B_big = 4096
    x_big = jax.random.normal(kx2, (B_big, D_in), jnp.float32)
    out_big = jax.block_until_ready(dqn_forward(x_big, w1_t, b1_2d, w2_t, b2_2d))
    assert out_big.shape == (B_big, D_out)
    assert jnp.allclose(out_big, _reference_bf16(x_big, w1_t, b1_2d, w2_t, b2_2d),
                        atol=2e-3, rtol=2e-3)

    print("KERNEL_OK")
</pallas_src>

<mosaic_0001>
module attributes {stable_mosaic.version = 11 : i64} {
  func.func @dqn_kernel(%arg0: memref<2x64xf32, #tpu.memory_space<vmem>>, %arg1: memref<64x128xbf16, #tpu.memory_space<vmem>>, %arg2: memref<1x128xf32, #tpu.memory_space<vmem>>, %arg3: memref<128x64xbf16, #tpu.memory_space<vmem>>, %arg4: memref<1x64xf32, #tpu.memory_space<vmem>>, %arg5: memref<2x64xf32, #tpu.memory_space<vmem>>) attributes {dimension_semantics = [], scalar_prefetch = 0 : i64, scratch_operands = 0 : i64, tpu.core_type = #tpu.core_type<tc>} {
    %c0 = arith.constant 0 : index
    %c0_0 = arith.constant 0 : index
    %0 = vector.load %arg0[%c0, %c0_0] : memref<2x64xf32, #tpu.memory_space<vmem>>, vector<2x64xf32>
    %1 = arith.truncf %0 : vector<2x64xf32> to vector<2x64xbf16>
    %c0_1 = arith.constant 0 : index
    %c0_2 = arith.constant 0 : index
    %2 = vector.load %arg1[%c0_1, %c0_2] : memref<64x128xbf16, #tpu.memory_space<vmem>>, vector<64x128xbf16>
    %cst = arith.constant dense<0.000000e+00> : vector<2x128xf32>
    %3 = tpu.matmul %1, %2, %cst {dimension_numbers = #tpu.dot_dimension_numbers<[1], [0], [0], [1], [0, 0, 1, 1], [], []>} : vector<2x64xbf16>, vector<64x128xbf16>, vector<2x128xf32> -> vector<2x128xf32>
    %c0_3 = arith.constant 0 : index
    %c0_4 = arith.constant 0 : index
    %4 = vector.load %arg2[%c0_3, %c0_4] : memref<1x128xf32, #tpu.memory_space<vmem>>, vector<1x128xf32>
    %5 = vector.broadcast %4 : vector<1x128xf32> to vector<2x128xf32>
    %6 = arith.addf %3, %5 : vector<2x128xf32>
    %cst_5 = arith.constant 0.000000e+00 : f32
    %7 = vector.broadcast %cst_5 : f32 to vector<2x128xf32>
    %8 = arith.maximumf %6, %7 : vector<2x128xf32>
    %9 = arith.truncf %8 : vector<2x128xf32> to vector<2x128xbf16>
    %c0_6 = arith.constant 0 : index
    %c0_7 = arith.constant 0 : index
    %10 = vector.load %arg3[%c0_6, %c0_7] : memref<128x64xbf16, #tpu.memory_space<vmem>>, vector<128x64xbf16>
    %cst_8 = arith.constant dense<0.000000e+00> : vector<2x64xf32>
    %11 = tpu.matmul %9, %10, %cst_8 {dimension_numbers = #tpu.dot_dimension_numbers<[1], [0], [0], [1], [0, 0, 1, 1], [], []>} : vector<2x128xbf16>, vector<128x64xbf16>, vector<2x64xf32> -> vector<2x64xf32>
    %c0_9 = arith.constant 0 : index
    %c0_10 = arith.constant 0 : index
    %12 = vector.load %arg4[%c0_9, %c0_10] : memref<1x64xf32, #tpu.memory_space<vmem>>, vector<1x64xf32>
    %13 = vector.broadcast %12 : vector<1x64xf32> to vector<2x64xf32>
    %14 = arith.addf %11, %13 : vector<2x64xf32>
    %c0_11 = arith.constant 0 : index
    %c0_12 = arith.constant 0 : index
    %15 = vector.load %arg5[%c0_11, %c0_12] : memref<2x64xf32, #tpu.memory_space<vmem>>, vector<2x64xf32>
    tpu.vector_store %arg5[%c0_11, %c0_12], %14 {strides = array<i32>} : memref<2x64xf32, #tpu.memory_space<vmem>>, vector<2x64xf32>,
    return
  }
}

</mosaic_0001>

<llo_original>
// kernel: tpu_custom_call.1
$region0: #{tpu_custom_call.1}
  #allocation0 [shape = 'u32[]', space=smem, size = 0x4, offset = 0x4, fixed_abs, tag = 'smem constant byte address 0x4 - core index']
  #allocation1 [shape = 'u32[144,128]{1,0:T(1,128)}', space=vmem, size = 0x12000, scoped, tag = 'internal scratch']
  %s0 = inlined_call_operand.vmem [shape: f32[2,64], index: 0, kind: input, shape index: {}]
  %s1 = inlined_call_operand.vmem [shape: bf16[64,128], index: 1, kind: input, shape index: {}]
  %s2 = inlined_call_operand.vmem [shape: f32[1,128], index: 2, kind: input, shape index: {}]
  %s3 = inlined_call_operand.vmem [shape: bf16[128,64], index: 3, kind: input, shape index: {}]
  %s4 = inlined_call_operand.vmem [shape: f32[1,64], index: 4, kind: input, shape index: {}]
  %s5 = inlined_call_operand.hbm [shape: f32[2,64], index: 5, kind: output, shape index: {}]
  %s6 = sld [smem:[#allocation0]]
  $region30: #{tpu_custom_call.1} parent=0
    _
  %s8 = ssub.s32 1, %s6
  %s9 = scalar_select 0, %s8, %s6
  $region1: #{tpu_custom_call.1} parent=0
    #allocation2 [shape = 'u8[1024]{0}', space=vmem, size = 0x400, scoped, tag = 'output window, operand 0, single buffered']
    #allocation3 [shape = 's32[1]{0}', space=sflag, size = 0x4, scoped, tag = 'scoped memory for tpu_custom_call.1']
    %10 = vsyncpa [#allocation3], 0
    // Predicated region
    $region2: #{tpu_custom_call.1} parent=1 // pred_check
      _
    $region3: #{tpu_custom_call.1} parent=1 // pred_check_branch
      %12 = sbr.rel (0) target = $region5
    $region4: #{tpu_custom_call.1} parent=1 // pred_region
      _
    $region5: #{tpu_custom_call.1} parent=1 // pred_fallthru
      _
    // Predicated region
    $region6: #{tpu_custom_call.1} parent=1 // pred_check
      _
    $region7: #{tpu_custom_call.1} parent=1 // pred_check_branch
      %14 = sbr.rel (0) target = $region9
    $region8: #{tpu_custom_call.1} parent=1 // pred_region
      _
    $region9: #{tpu_custom_call.1} parent=1 // pred_fallthru
      _
    // Predicated region
    $region10: #{tpu_custom_call.1} parent=1 // pred_check
      _
    $region11: #{tpu_custom_call.1} parent=1 // pred_check_branch
      %16 = sbr.rel (0) target = $region13
    $region12: #{tpu_custom_call.1} parent=1 // pred_region
      _
    $region13: #{tpu_custom_call.1} parent=1 // pred_fallthru
      _
    // Predicated region
    $region14: #{tpu_custom_call.1} parent=1 // pred_check
      _
    $region15: #{tpu_custom_call.1} parent=1 // pred_check_branch
      %18 = sbr.rel (0) target = $region17
    $region16: #{tpu_custom_call.1} parent=1 // pred_region
      _
    $region17: #{tpu_custom_call.1} parent=1 // pred_fallthru
      _
    // Predicated region
    $region18: #{tpu_custom_call.1} parent=1 // pred_check
      _
    $region19: #{tpu_custom_call.1} parent=1 // pred_check_branch
      %20 = sbr.rel (0) target = $region21
    $region20: #{tpu_custom_call.1} parent=1 // pred_region
      _
    $region21: #{tpu_custom_call.1} parent=1 // pred_fallthru
      _
    %v22 = vld [vmem:[%s0] sm:$0x3]
    %v23 = vpack.c.bf16 %v22, %v22
    %v24 = vld [vmem:[%s1] sm:$0xf]
    %v25 = vld [vmem:[%s1 + $0x4] sm:$0xf]
    %v26 = vld [vmem:[%s1 + $0x8] sm:$0xf]
    %v27 = vld [vmem:[%s1 + $0xc] sm:$0xf]
    %v28 = vld [vmem:[%s1 + $0x10] sm:$0xf]
    %v29 = vld [vmem:[%s1 + $0x14] sm:$0xf]
    %v30 = vld [vmem:[%s1 + $0x18] sm:$0xf]
    %v31 = vld [vmem:[%s1 + $0x1c] sm:$0xf]
    %v32 = vld [vmem:[%s2] sm:$0x1]
    %v34 = vlaneseq
    %v35 = vshrl.u32 %v34, 7
    %v36 = vsub.s32 0, %v35
    %v37 = vrot.slane %v32, %v36
    %v47 = vunpack.c.l.b16 %v24
    %v48 = vunpack.c.l.b16 %v25
    %v49 = vunpack.c.l.b16 %v26
    %v50 = vunpack.c.l.b16 %v27
    %v51 = vunpack.c.l.b16 %v28
    %v52 = vunpack.c.l.b16 %v29
    %v53 = vunpack.c.l.b16 %v30
    %v54 = vunpack.c.l.b16 %v31
    %v55 = vpack.c.b16 %v48, %v47
    %v56 = vpack.c.b16 %v50, %v49
    %v57 = vpack.c.b16 %v52, %v51
    %v58 = vpack.c.b16 %v54, %v53
    %vm63 = vcmask 523264
    %v65 = vsel %vm63, %v23, 0
    %67 = vmatprep.subr.bf16.mxu0 0
    %68 = vmatpush1.bf16.msra.mxu0 0
    %69 = vmatprep.subr.bf16.mxu0 0
    %70 = vmatpush1.bf16.msra.mxu0 0
    %71 = vmatprep.subr.bf16.mxu0 0
    %72 = vmatpush1.bf16.msra.mxu0 0
    %73 = vmatprep.subr.bf16.mxu0 0
    %74 = vmatpush1.bf16.msra.mxu0 0
    %75 = vmatprep.subr.bf16.mxu0 0
    %76 = vmatpush1.bf16.msra.mxu0 %v58
    %77 = vmatprep.subr.bf16.mxu0 0
    %78 = vmatpush1.bf16.msra.mxu0 %v57
    %79 = vmatprep.subr.bf16.mxu0 0
    %80 = vmatpush1.bf16.msra.mxu0 %v56
    %81 = vmatprep.subr.bf16.mxu0 0
    %82 = vmatpush1.bf16.msra.mxu0 %v55
    %83 = vmatprep.subr.bf16.mxu0 0
    %84 = vmatpush2.bf16.msra.mxu0 0
    %85 = vmatprep.subr.bf16.mxu0 0
    %86 = vmatpush2.bf16.msra.mxu0 0
    %87 = vmatprep.subr.bf16.mxu0 0
    %88 = vmatpush2.bf16.msra.mxu0 0
    %89 = vmatprep.subr.bf16.mxu0 0
    %90 = vmatpush2.bf16.msra.mxu0 0
    %91 = vmatprep.subr.bf16.mxu0 0
    %92 = vmatpush2.bf16.msra.mxu0 0
    %93 = vmatprep.subr.bf16.mxu0 0
    %94 = vmatpush2.bf16.msra.mxu0 0
    %95 = vmatprep.subr.bf16.mxu0 0
    %96 = vmatpush2.bf16.msra.mxu0 0
    %97 = vmatprep.subr.bf16.mxu0 0
    %98 = vmatpush2.bf16.msra.mxu0 0
    %99 = vmatprep.mubr.bf16.mxu0 0
    %100 = vmatmul.mubr.bf16.gmra.mxu0 %v65
    %v101 = vpop.f32.mrf.mxu0
    %v102 = vadd.f32 %v37, %v101
    %v103 = vpop.f32.mrf.mxu0
    %v104 = vpop.f32.mrf.mxu0
    %v105 = vpop.f32.mrf.mxu0
    %106 = vdwg.mxu0
    %v107 = vmax.f32 %v102, 0.0
    %v108 = vpack.c.bf16 %v107, %v107
    %v109 = vld [vmem:[%s3] sm:$0xf]
    %v110 = vld [vmem:[%s3 + $0x4] sm:$0xf]
    %v111 = vld [vmem:[%s3 + $0x8] sm:$0xf]
    %v112 = vld [vmem:[%s3 + $0xc] sm:$0xf]
    %v113 = vld [vmem:[%s3 + $0x10] sm:$0xf]
    %v114 = vld [vmem:[%s3 + $0x14] sm:$0xf]
    %v115 = vld [vmem:[%s3 + $0x18] sm:$0xf]
    %v116 = vld [vmem:[%s3 + $0x1c] sm:$0xf]
    %v117 = vld [vmem:[%s3 + $0x20] sm:$0xf]
    %v118 = vld [vmem:[%s3 + $0x24] sm:$0xf]
    %v119 = vld [vmem:[%s3 + $0x28] sm:$0xf]
    %v120 = vld [vmem:[%s3 + $0x2c] sm:$0xf]
    %v121 = vld [vmem:[%s3 + $0x30] sm:$0xf]
    %v122 = vld [vmem:[%s3 + $0x34] sm:$0xf]
    %v123 = vld [vmem:[%s3 + $0x38] sm:$0xf]
    %v124 = vld [vmem:[%s3 + $0x3c] sm:$0xf]
    %v125 = vld [vmem:[%s4] sm:$0x1]
    %v127 = vlaneseq
    %v128 = vshrl.u32 %v127, 7
    %v129 = vsub.s32 0, %v128
    %v130 = vrot.slane %v125, %v129
    %v148 = vunpack.c.l.b16 %v109
    %v149 = vunpack.c.l.b16 %v110
    %v150 = vunpack.c.l.b16 %v111
    %v151 = vunpack.c.l.b16 %v112
    %v152 = vunpack.c.l.b16 %v113
    %v153 = vunpack.c.l.b16 %v114
    %v154 = vunpack.c.l.b16 %v115
    %v155 = vunpack.c.l.b16 %v116
    %v156 = vunpack.c.l.b16 %v117
    %v157 = vunpack.c.l.b16 %v118
    %v158 = vunpack.c.l.b16 %v119
    %v159 = vunpack.c.l.b16 %v120
    %v160 = vunpack.c.l.b16 %v121
    %v161 = vunpack.c.l.b16 %v122
    %v162 = vunpack.c.l.b16 %v123
    %v163 = vunpack.c.l.b16 %v124
    %v164 = vpack.c.b16 %v149, %v148
    %v165 = vpack.c.b16 %v151, %v150
    %v166 = vpack.c.b16 %v153, %v152
    %v167 = vpack.c.b16 %v155, %v154
    %v168 = vpack.c.b16 %v157, %v156
    %v169 = vpack.c.b16 %v159, %v158
    %v170 = vpack.c.b16 %v161, %v160
    %v171 = vpack.c.b16 %v163, %v162
    %180 = vmatprep.subr.bf16.mxu0 0
    %181 = vmatpush1.bf16.msra.mxu0 %v171
    %182 = vmatprep.subr.bf16.mxu0 0
    %183 = vmatpush1.bf16.msra.mxu0 %v170
    %184 = vmatprep.subr.bf16.mxu0 0
    %185 = vmatpush1.bf16.msra.mxu0 %v169
    %186 = vmatprep.subr.bf16.mxu0 0
    %187 = vmatpush1.bf16.msra.mxu0 %v168
    %188 = vmatprep.subr.bf16.mxu0 0
    %189 = vmatpush1.bf16.msra.mxu0 %v167
    %190 = vmatprep.subr.bf16.mxu0 0
    %191 = vmatpush1.bf16.msra.mxu0 %v166
    %192 = vmatprep.subr.bf16.mxu0 0
    %193 = vmatpush1.bf16.msra.mxu0 %v165
    %194 = vmatprep.subr.bf16.mxu0 0
    %195 = vmatpush1.bf16.msra.mxu0 %v164
    %196 = vmatprep.subr.bf16.mxu0 0
    %197 = vmatpush2.bf16.msra.mxu0 0
    %198 = vmatprep.subr.bf16.mxu0 0
    %199 = vmatpush2.bf16.msra.mxu0 0
    %200 = vmatprep.subr.bf16.mxu0 0
    %201 = vmatpush2.bf16.msra.mxu0 0
    %202 = vmatprep.subr.bf16.mxu0 0
    %203 = vmatpush2.bf16.msra.mxu0 0
    %204 = vmatprep.subr.bf16.mxu0 0
    %205 = vmatpush2.bf16.msra.mxu0 0
    %206 = vmatprep.subr.bf16.mxu0 0
    %207 = vmatpush2.bf16.msra.mxu0 0
    %208 = vmatprep.subr.bf16.mxu0 0
    %209 = vmatpush2.bf16.msra.mxu0 0
    %210 = vmatprep.subr.bf16.mxu0 0
    %211 = vmatpush2.bf16.msra.mxu0 0
    %212 = vmatprep.mubr.bf16.mxu0 0
    %213 = vmatmul.mubr.bf16.gmra.mxu0 %v108
    %v214 = vpop.f32.mrf.mxu0
    %v215 = vadd.f32 %v130, %v214
    %v216 = vpop.f32.mrf.mxu0
    %v217 = vpop.f32.mrf.mxu0
    %v218 = vpop.f32.mrf.mxu0
    %219 = vdwg.mxu0
    %vm220 = vcmask 517120
    %221 = vst.msk [vmem:[#allocation2] sm:$0x3] %vm220, %v215
    // Predicated region
    $region22: #{tpu_custom_call.1} parent=1 // pred_check
      _
    $region23: #{tpu_custom_call.1} parent=1 // pred_check_branch
      %223 = sbr.rel (0) target = $region25
    $region24: #{tpu_custom_call.1} parent=1 // pred_region
      %s225 = ssub.s32 32, 32
      %226 = vsyncadd [#allocation3], %s225
      %s228 = sshll.u32 [#allocation2], 4
      %s229 = int_to_ptr.vmem [resolvable:$true] %s228
      %231 = dma.vmem_to_hbm [thread:$0]  %s229, 32, %s5, [#allocation3]
    $region25: #{tpu_custom_call.1} parent=1 // pred_fallthru
      _
    // Predicated region
    $region26: #{tpu_custom_call.1} parent=1 // pred_check
      _
    $region27: #{tpu_custom_call.1} parent=1 // pred_check_branch
      %233 = sbr.rel (0) target = $region29
    $region28: #{tpu_custom_call.1} parent=1 // pred_region
      %234 = dma.done [#allocation3], 32
    $region29: #{tpu_custom_call.1} parent=1 // pred_fallthru
      _
    %235 = vsyncpa [#allocation3], 1

</llo_original>
